<compile_context>
chip_gen: v5e
topology: v5e:2x2
jax: 0.10.0
libtpu: 0.0.40
codegen_flags: <defaults>
</compile_context>

<pallas_src>
import jax
import jax.numpy as jnp
from jax import lax
from jax.experimental import pallas as pl
from jax.experimental.pallas import tpu as pltpu

D_IN, D_HID, D_OUT = 10, 5, 2
PACK = 8          # batch rows packed per lane-dense row (8*10 = 80 of 128 lanes)
LANE = 128


def _round_up(x, m):
    return ((x + m - 1) // m) * m


def mlp_kernel(k1_ref, b1_ref, k2_ref, b2_ref, x_ref, o_ref):
    """x_ref: [tb/PACK, PACK*D_IN] packed batch tile; weights resident across grid.

    Computes, for each packed row r holding 8 batch rows:
        h = relu(x @ kron(I8, W1) + tile(b1, 8))
        y = h @ kron(I8, W2) + tile(b2, 8)
    which is exactly relu(x_i @ W1 + b1) @ W2 + b2 per original batch row.
    """
    h = jnp.dot(x_ref[...], k1_ref[...], preferred_element_type=jnp.float32)
    h = jnp.maximum(h + b1_ref[...], 0.0)                       # bias + ReLU (VPU)
    y = jnp.dot(h, k2_ref[...], preferred_element_type=jnp.float32)
    o_ref[...] = (y + b2_ref[...]).astype(o_ref.dtype)


@jax.jit
def mymodel_forward(x, w1, b1, w2, b2):
    """x: [B, 10] f32; w1: [10, 5]; b1: [5]; w2: [5, 2]; b2: [2] -> [B, 2].

    Weights are stored as [in, out] (transposed vs. PyTorch's [out, in]), so the
    math is x @ W + b, identical to PyTorch's x @ W_pt.T + b.
    """
    B = x.shape[0]

    # ---- batch-tile selection (all static under jit) ----------------------
    # Target 32K-64K rows per grid step (1.5-3 MiB HBM traffic >> 0.35us step
    # overhead) but keep >=4 steps for large batches (v7x 2-TC balance) and
    # round to 128 so packed blocks satisfy the (8,128) tiling constraint.
    steps = max(pl.cdiv(B, 65536), min(4, pl.cdiv(B, 32768)))
    tb = _round_up(pl.cdiv(B, steps), LANE)      # rows per grid step
    grid = pl.cdiv(B, tb)
    Bp = grid * tb

    # Pad only the final partial tile (no-op copy is elided when B % tb == 0).
    if Bp != B:
        x = jnp.pad(x, ((0, Bp - B), (0, 0)))

    # Free row-major reshape: pack PACK batch rows into one lane-dense row.
    x_packed = x.reshape(Bp // PACK, PACK * D_IN)                  # [Bp/8, 80]

    # Block-diagonal weights so packed rows go through two ordinary MXU matmuls.
    eye = jnp.eye(PACK, dtype=x.dtype)
    k1 = jnp.kron(eye, w1)                                         # [80, 40]
    k2 = jnp.kron(eye, w2)                                         # [40, 16]
    b1p = jnp.tile(b1, PACK).reshape(1, PACK * D_HID)              # [1, 40]
    b2p = jnp.tile(b2, PACK).reshape(1, PACK * D_OUT)              # [1, 16]

    rows_per_step = tb // PACK                                     # multiple of 16

    cost = pl.CostEstimate(
        flops=2 * (Bp // PACK) * (PACK * D_IN * PACK * D_HID
                                  + PACK * D_HID * PACK * D_OUT),
        transcendentals=0,
        bytes_accessed=4 * (Bp * (D_IN + D_OUT)
                            + PACK * PACK * (D_IN * D_HID + D_HID * D_OUT)
                            + PACK * (D_HID + D_OUT)),
    )

    out_packed = pl.pallas_call(
        mlp_kernel,
        out_shape=jax.ShapeDtypeStruct((Bp // PACK, PACK * D_OUT), x.dtype),
        grid=(grid,),
        in_specs=[
            pl.BlockSpec((PACK * D_IN, PACK * D_HID), lambda i: (0, 0)),    # kron(I8,W1)
            pl.BlockSpec((1, PACK * D_HID), lambda i: (0, 0)),              # b1 packed
            pl.BlockSpec((PACK * D_HID, PACK * D_OUT), lambda i: (0, 0)),   # kron(I8,W2)
            pl.BlockSpec((1, PACK * D_OUT), lambda i: (0, 0)),              # b2 packed
            pl.BlockSpec((rows_per_step, PACK * D_IN), lambda i: (i, 0)),   # x tile
        ],
        out_specs=pl.BlockSpec((rows_per_step, PACK * D_OUT), lambda i: (i, 0)),
        compiler_params=pltpu.CompilerParams(
            dimension_semantics=("parallel",),      # megacore sharding on v7x
            vmem_limit_bytes=48 * 1024 * 1024,      # headroom over v5e's 16 MiB default
        ),
        cost_estimate=cost,
    )(k1, b1p, k2, b2p, x_packed)

    out = out_packed.reshape(Bp, D_OUT)             # free reshape back to [Bp, 2]
    return out if Bp == B else out[:B]


def init_params(key):
    # Deterministic init mimicking PyTorch Linear's uniform(-1/sqrt(fan_in), +).
    k1, k2, k3, k4 = jax.random.split(key, 4)
    bound1 = 1.0 / jnp.sqrt(float(D_IN))
    bound2 = 1.0 / jnp.sqrt(float(D_HID))
    # Stored as [in, out] (transposed vs. PyTorch's [out, in]) so math is x @ W + b.
    w1 = jax.random.uniform(k1, (D_IN, D_HID), jnp.float32, -bound1, bound1)
    b1 = jax.random.uniform(k2, (D_HID,), jnp.float32, -bound1, bound1)
    w2 = jax.random.uniform(k3, (D_HID, D_OUT), jnp.float32, -bound2, bound2)
    b2 = jax.random.uniform(k4, (D_OUT,), jnp.float32, -bound2, bound2)
    return w1, b1, w2, b2


if __name__ == "__main__":
    key = jax.random.PRNGKey(0)
    kx, kp = jax.random.split(key)
    batch = 8
    x = jax.random.normal(kx, (batch, D_IN), jnp.float32)
    w1, b1, w2, b2 = init_params(kp)

    out = jax.block_until_ready(mymodel_forward(x, w1, b1, w2, b2))

    # Reference in plain JAX (same math as the PyTorch forward), full f32 dots.
    ref = jnp.maximum(jnp.dot(x, w1, precision=lax.Precision.HIGHEST) + b1, 0.0)
    ref = jnp.dot(ref, w2, precision=lax.Precision.HIGHEST) + b2

    assert out.shape == (batch, D_OUT)
    assert jnp.allclose(out, ref, atol=1e-4, rtol=1e-4)

    print("KERNEL_OK")
</pallas_src>

<mosaic_0001>
module attributes {stable_mosaic.version = 11 : i64} {
  func.func @mlp_kernel(%arg0: i32, %arg1: memref<80x40xf32, #tpu.memory_space<vmem>>, %arg2: memref<1x40xf32, #tpu.memory_space<vmem>>, %arg3: memref<40x16xf32, #tpu.memory_space<vmem>>, %arg4: memref<1x16xf32, #tpu.memory_space<vmem>>, %arg5: memref<16x80xf32, #tpu.memory_space<vmem>>, %arg6: memref<16x16xf32, #tpu.memory_space<vmem>>) attributes {dimension_semantics = [#tpu.dimension_semantics<parallel>], iteration_bounds = array<i64: 1>, scalar_prefetch = 0 : i64, scratch_operands = 0 : i64, tpu.core_type = #tpu.core_type<tc>, window_params = [{pipeline_mode = #tpu.pipeline_mode<synchronous>, transform_indices = @transform_0, window_bounds = array<i64: 80, 40>}, {pipeline_mode = #tpu.pipeline_mode<synchronous>, transform_indices = @transform_1, window_bounds = array<i64: 1, 40>}, {pipeline_mode = #tpu.pipeline_mode<synchronous>, transform_indices = @transform_2, window_bounds = array<i64: 40, 16>}, {pipeline_mode = #tpu.pipeline_mode<synchronous>, transform_indices = @transform_3, window_bounds = array<i64: 1, 16>}, {transform_indices = @transform_4, window_bounds = array<i64: 16, 80>}, {transform_indices = @transform_5, window_bounds = array<i64: 16, 16>}]} {
    %c0 = arith.constant 0 : index
    %c0_0 = arith.constant 0 : index
    %0 = vector.load %arg5[%c0, %c0_0] : memref<16x80xf32, #tpu.memory_space<vmem>>, vector<16x80xf32>
    %c0_1 = arith.constant 0 : index
    %c0_2 = arith.constant 0 : index
    %1 = vector.load %arg1[%c0_1, %c0_2] : memref<80x40xf32, #tpu.memory_space<vmem>>, vector<80x40xf32>
    %cst = arith.constant dense<0.000000e+00> : vector<16x40xf32>
    %2 = tpu.matmul %0, %1, %cst {dimension_numbers = #tpu.dot_dimension_numbers<[1], [0], [0], [1], [0, 0, 1, 1], [], []>} : vector<16x80xf32>, vector<80x40xf32>, vector<16x40xf32> -> vector<16x40xf32>
    %c0_3 = arith.constant 0 : index
    %c0_4 = arith.constant 0 : index
    %3 = vector.load %arg2[%c0_3, %c0_4] : memref<1x40xf32, #tpu.memory_space<vmem>>, vector<1x40xf32>
    %4 = vector.broadcast %3 : vector<1x40xf32> to vector<16x40xf32>
    %5 = arith.addf %2, %4 : vector<16x40xf32>
    %cst_5 = arith.constant 0.000000e+00 : f32
    %6 = vector.broadcast %cst_5 : f32 to vector<16x40xf32>
    %7 = arith.maximumf %5, %6 : vector<16x40xf32>
    %c0_6 = arith.constant 0 : index
    %c0_7 = arith.constant 0 : index
    %8 = vector.load %arg3[%c0_6, %c0_7] : memref<40x16xf32, #tpu.memory_space<vmem>>, vector<40x16xf32>
    %cst_8 = arith.constant dense<0.000000e+00> : vector<16x16xf32>
    %9 = tpu.matmul %7, %8, %cst_8 {dimension_numbers = #tpu.dot_dimension_numbers<[1], [0], [0], [1], [0, 0, 1, 1], [], []>} : vector<16x40xf32>, vector<40x16xf32>, vector<16x16xf32> -> vector<16x16xf32>
    %c0_9 = arith.constant 0 : index
    %c0_10 = arith.constant 0 : index
    %10 = vector.load %arg4[%c0_9, %c0_10] : memref<1x16xf32, #tpu.memory_space<vmem>>, vector<1x16xf32>
    %11 = vector.broadcast %10 : vector<1x16xf32> to vector<16x16xf32>
    %12 = arith.addf %9, %11 : vector<16x16xf32>
    %c0_11 = arith.constant 0 : index
    %c0_12 = arith.constant 0 : index
    %13 = vector.load %arg6[%c0_11, %c0_12] : memref<16x16xf32, #tpu.memory_space<vmem>>, vector<16x16xf32>
    tpu.vector_store %arg6[%c0_11, %c0_12], %12 {strides = array<i32>} : memref<16x16xf32, #tpu.memory_space<vmem>>, vector<16x16xf32>,
    return
  }
  func.func @transform_0(%arg0: i32) -> (i32, i32) {
    %c0_i32 = arith.constant 0 : i32
    %c0_i32_0 = arith.constant 0 : i32
    %c0_i32_1 = arith.constant 0 : i32
    return %c0_i32, %c0_i32_0 : i32, i32
  }
  func.func @transform_1(%arg0: i32) -> (i32, i32) {
    %c0_i32 = arith.constant 0 : i32
    %c0_i32_0 = arith.constant 0 : i32
    %c0_i32_1 = arith.constant 0 : i32
    return %c0_i32, %c0_i32_0 : i32, i32
  }
  func.func @transform_2(%arg0: i32) -> (i32, i32) {
    %c0_i32 = arith.constant 0 : i32
    %c0_i32_0 = arith.constant 0 : i32
    %c0_i32_1 = arith.constant 0 : i32
    return %c0_i32, %c0_i32_0 : i32, i32
  }
  func.func @transform_3(%arg0: i32) -> (i32, i32) {
    %c0_i32 = arith.constant 0 : i32
    %c0_i32_0 = arith.constant 0 : i32
    %c0_i32_1 = arith.constant 0 : i32
    return %c0_i32, %c0_i32_0 : i32, i32
  }
  func.func @transform_4(%arg0: i32) -> (i32, i32) {
    %c0_i32 = arith.constant 0 : i32
    %c0_i32_0 = arith.constant 0 : i32
    return %arg0, %c0_i32 : i32, i32
  }
  func.func @transform_5(%arg0: i32) -> (i32, i32) {
    %c0_i32 = arith.constant 0 : i32
    %c0_i32_0 = arith.constant 0 : i32
    return %arg0, %c0_i32 : i32, i32
  }
}

</mosaic_0001>

<llo_original>
// kernel: tile.13
$region0: #{tile.13}
  #allocation0 [shape = 's32[1]{0}', space=sflag, size = 0x4, scoped, tag = 'scoped memory for tile.13']
  %s0 = inlined_call_operand.vmem [shape: f32[5], index: 0, kind: input, shape index: {}]
  %s1 = inlined_call_operand.vmem [shape: f32[8,5], index: 1, kind: output, shape index: {}]
  // Predicated region
  $region2: #{tile.13} parent=0 // pred_check
    _
  $region3: #{tile.13} parent=0 // pred_check_branch
    %3 = sbr.rel (0) target = $region5
  $region4: #{tile.13} parent=0 // pred_region
    _
  $region5: #{tile.13} parent=0 // pred_fallthru
    _
  %v4 = vld [vmem:[%s0] ss:$0 sm:$0xff]
  %5 = vst [vmem:[%s1] sm:$0xff] %v4

// kernel: tile.14
$region0: #{tile.14}
  %s0 = inlined_call_operand.vmem [shape: f32[8,5], index: 0, kind: input, shape index: {}]
  %s1 = inlined_call_operand.vmem [shape: f32[1,40], index: 1, kind: output, shape index: {}]
  $region1: #{tile.14} parent=0
    #allocation0 [shape = 'u8[4096]{0}', space=vmem, size = 0x1000, scoped, tag = 'scoped mem for output reshape']
    %v2 = vld [vmem:[%s0] sm:$0x1]
    %vm3 = vcmask 39936
    %4 = vst.msk [vmem:[#allocation0] sm:$0x1] %vm3, %v2
    %s5 = scalar_lea.vmem %s0, 7
    %v6 = vld [vmem:[%s5] sm:$0x1]
    %7 = vrot.lane.b32.xlu0 %v6, 35
    %v8 = vpop.permute.xlu0 %7
    %vm9 = vcmask 326936
    %10 = vst.msk [vmem:[#allocation0] sm:$0x1] %vm9, %v8
    %s11 = scalar_lea.vmem %s0, 6
    %v12 = vld [vmem:[%s11] sm:$0x1]
    %13 = vrot.lane.b32.xlu0 %v12, 30
    %v14 = vpop.permute.xlu0 %13
    %vm15 = vcmask 285936
    %16 = vst.msk [vmem:[#allocation0] sm:$0x1] %vm15, %v14
    %s17 = scalar_lea.vmem %s0, 5
    %v18 = vld [vmem:[%s17] sm:$0x1]
    %19 = vrot.lane.b32.xlu0 %v18, 25
    %v20 = vpop.permute.xlu0 %19
    %vm21 = vcmask 244936
    %22 = vst.msk [vmem:[#allocation0] sm:$0x1] %vm21, %v20
    %s23 = scalar_lea.vmem %s0, 4
    %v24 = vld [vmem:[%s23] sm:$0x1]
    %25 = vrot.lane.b32.xlu0 %v24, 20
    %v26 = vpop.permute.xlu0 %25
    %vm27 = vcmask 203936
    %28 = vst.msk [vmem:[#allocation0] sm:$0x1] %vm27, %v26
    %s29 = scalar_lea.vmem %s0, 3
    %v30 = vld [vmem:[%s29] sm:$0x1]
    %31 = vrot.lane.b32.xlu0 %v30, 15
    %v32 = vpop.permute.xlu0 %31
    %vm33 = vcmask 162936
    %34 = vst.msk [vmem:[#allocation0] sm:$0x1] %vm33, %v32
    %s35 = scalar_lea.vmem %s0, 2
    %v36 = vld [vmem:[%s35] sm:$0x1]
    %37 = vrot.lane.b32.xlu0 %v36, 10
    %v38 = vpop.permute.xlu0 %37
    %vm39 = vcmask 121936
    %40 = vst.msk [vmem:[#allocation0] sm:$0x1] %vm39, %v38
    %s41 = scalar_lea.vmem %s0, 1
    %v42 = vld [vmem:[%s41] sm:$0x1]
    %43 = vrot.lane.b32.xlu0 %v42, 5
    %v44 = vpop.permute.xlu0 %43
    %vm45 = vcmask 80936
    %46 = vst.msk [vmem:[#allocation0] sm:$0x1] %vm45, %v44
    %s48 = ssub.s32 2, 1
    %v49 = vld [vmem:[#allocation0] sm:%s48]
    %s51 = ssub.s32 2, 1
    %52 = vst [vmem:[%s1] sm:%s51] %v49

// kernel: tile.18
$region0: #{tile.18}
  #allocation0 [shape = 's32[1]{0}', space=sflag, size = 0x4, scoped, tag = 'scoped memory for tile.18']
  %s0 = inlined_call_operand.vmem [shape: f32[2], index: 0, kind: input, shape index: {}]
  %s1 = inlined_call_operand.vmem [shape: f32[8,2], index: 1, kind: output, shape index: {}]
  // Predicated region
  $region2: #{tile.18} parent=0 // pred_check
    _
  $region3: #{tile.18} parent=0 // pred_check_branch
    %3 = sbr.rel (0) target = $region5
  $region4: #{tile.18} parent=0 // pred_region
    _
  $region5: #{tile.18} parent=0 // pred_fallthru
    _
  %v4 = vld [vmem:[%s0] ss:$0 sm:$0xff]
  %5 = vst [vmem:[%s1] sm:$0xff] %v4

// kernel: tile.19
$region0: #{tile.19}
  %s0 = inlined_call_operand.vmem [shape: f32[8,2], index: 0, kind: input, shape index: {}]
  %s1 = inlined_call_operand.vmem [shape: f32[1,16], index: 1, kind: output, shape index: {}]
  $region1: #{tile.19} parent=0
    #allocation0 [shape = 'u8[4096]{0}', space=vmem, size = 0x1000, scoped, tag = 'scoped mem for output reshape']
    %v2 = vld [vmem:[%s0] sm:$0x1]
    %vm3 = vcmask 15360
    %4 = vst.msk [vmem:[#allocation0] sm:$0x1] %vm3, %v2
    %s5 = scalar_lea.vmem %s0, 7
    %v6 = vld [vmem:[%s5] sm:$0x1]
    %7 = vrot.lane.b32.xlu0 %v6, 14
    %v8 = vpop.permute.xlu0 %7
    %vm9 = vcmask 130160
    %10 = vst.msk [vmem:[#allocation0] sm:$0x1] %vm9, %v8
    %s11 = scalar_lea.vmem %s0, 6
    %v12 = vld [vmem:[%s11] sm:$0x1]
    %13 = vrot.lane.b32.xlu0 %v12, 12
    %v14 = vpop.permute.xlu0 %13
    %vm15 = vcmask 113760
    %16 = vst.msk [vmem:[#allocation0] sm:$0x1] %vm15, %v14
    %s17 = scalar_lea.vmem %s0, 5
    %v18 = vld [vmem:[%s17] sm:$0x1]
    %19 = vrot.lane.b32.xlu0 %v18, 10
    %v20 = vpop.permute.xlu0 %19
    %vm21 = vcmask 97360
    %22 = vst.msk [vmem:[#allocation0] sm:$0x1] %vm21, %v20
    %s23 = scalar_lea.vmem %s0, 4
    %v24 = vld [vmem:[%s23] sm:$0x1]
    %25 = vrot.lane.b32.xlu0 %v24, 8
    %v26 = vpop.permute.xlu0 %25
    %vm27 = vcmask 80960
    %28 = vst.msk [vmem:[#allocation0] sm:$0x1] %vm27, %v26
    %s29 = scalar_lea.vmem %s0, 3
    %v30 = vld [vmem:[%s29] sm:$0x1]
    %31 = vrot.lane.b32.xlu0 %v30, 6
    %v32 = vpop.permute.xlu0 %31
    %vm33 = vcmask 64560
    %34 = vst.msk [vmem:[#allocation0] sm:$0x1] %vm33, %v32
    %s35 = scalar_lea.vmem %s0, 2
    %v36 = vld [vmem:[%s35] sm:$0x1]
    %37 = vrot.lane.b32.xlu0 %v36, 4
    %v38 = vpop.permute.xlu0 %37
    %vm39 = vcmask 48160
    %40 = vst.msk [vmem:[#allocation0] sm:$0x1] %vm39, %v38
    %s41 = scalar_lea.vmem %s0, 1
    %v42 = vld [vmem:[%s41] sm:$0x1]
    %43 = vrot.lane.b32.xlu0 %v42, 2
    %v44 = vpop.permute.xlu0 %43
    %vm45 = vcmask 31760
    %46 = vst.msk [vmem:[#allocation0] sm:$0x1] %vm45, %v44
    %s48 = ssub.s32 2, 1
    %v49 = vld [vmem:[#allocation0] sm:%s48]
    %s51 = ssub.s32 2, 1
    %52 = vst [vmem:[%s1] sm:%s51] %v49

// kernel: mymodel_forward.1
$region0: #{mymodel_forward.1}
  #allocation0 [shape = 'u32[]', space=smem, size = 0x4, offset = 0x4, fixed_abs, tag = 'smem constant byte address 0x4 - core index']
  #allocation1 [shape = 'u32[72,128]{1,0:T(1,128)}', space=vmem, size = 0x9000, scoped, tag = 'internal scratch']
  %s0 = inlined_call_operand.vmem [shape: f32[80,40], index: 0, kind: input, shape index: {}]
  %s1 = inlined_call_operand.vmem [shape: f32[1,40], index: 1, kind: input, shape index: {}]
  %s2 = inlined_call_operand.vmem [shape: f32[40,16], index: 2, kind: input, shape index: {}]
  %s3 = inlined_call_operand.vmem [shape: f32[1,16], index: 3, kind: input, shape index: {}]
  %s4 = inlined_call_operand.vmem [shape: f32[16,80], index: 4, kind: input, shape index: {}]
  %s5 = inlined_call_operand.vmem [shape: f32[16,16], index: 5, kind: output, shape index: {}]
  %s6 = sld [smem:[#allocation0]]
  $region30: #{mymodel_forward.1} parent=0
    _
  %s8 = ssub.s32 1, %s6
  %s9 = scalar_select 0, %s8, %s6
  // Predicated region
  $region2: #{mymodel_forward.1} parent=0 // pred_check
    _
  $region3: #{mymodel_forward.1} parent=0 // pred_check_branch
    %11 = sbr.rel (0) target = $region5
  $region4: #{mymodel_forward.1} parent=0 // pred_region
    _
  $region5: #{mymodel_forward.1} parent=0 // pred_fallthru
    _
  // Predicated region
  $region6: #{mymodel_forward.1} parent=0 // pred_check
    _
  $region7: #{mymodel_forward.1} parent=0 // pred_check_branch
    %13 = sbr.rel (0) target = $region9
  $region8: #{mymodel_forward.1} parent=0 // pred_region
    _
  $region9: #{mymodel_forward.1} parent=0 // pred_fallthru
    _
  // Predicated region
  $region10: #{mymodel_forward.1} parent=0 // pred_check
    _
  $region11: #{mymodel_forward.1} parent=0 // pred_check_branch
    %15 = sbr.rel (0) target = $region13
  $region12: #{mymodel_forward.1} parent=0 // pred_region
    _
  $region13: #{mymodel_forward.1} parent=0 // pred_fallthru
    _
  // Predicated region
  $region14: #{mymodel_forward.1} parent=0 // pred_check
    _
  $region15: #{mymodel_forward.1} parent=0 // pred_check_branch
    %17 = sbr.rel (0) target = $region17
  $region16: #{mymodel_forward.1} parent=0 // pred_region
    _
  $region17: #{mymodel_forward.1} parent=0 // pred_fallthru
    _
  // Predicated region
  $region18: #{mymodel_forward.1} parent=0 // pred_check
    _
  $region19: #{mymodel_forward.1} parent=0 // pred_check_branch
    %19 = sbr.rel (0) target = $region21
  $region20: #{mymodel_forward.1} parent=0 // pred_region
    _
  $region21: #{mymodel_forward.1} parent=0 // pred_fallthru
    _
  %v20 = vld [vmem:[%s4] sm:$0xff]
  %v21 = vld [vmem:[%s4 + $0x8] sm:$0xff]
  %v22 = vld [vmem:[%s0] sm:$0xff]
  %v23 = vld [vmem:[%s0 + $0x8] sm:$0xff]
  %v24 = vld [vmem:[%s0 + $0x10] sm:$0xff]
  %v25 = vld [vmem:[%s0 + $0x18] sm:$0xff]
  %v26 = vld [vmem:[%s0 + $0x20] sm:$0xff]
  %v27 = vld [vmem:[%s0 + $0x28] sm:$0xff]
  %v28 = vld [vmem:[%s0 + $0x30] sm:$0xff]
  %v29 = vld [vmem:[%s0 + $0x38] sm:$0xff]
  %v30 = vld [vmem:[%s0 + $0x40] sm:$0xff]
  %v31 = vld [vmem:[%s0 + $0x48] sm:$0xff]
  %v32 = vld [vmem:[%s1] sm:$0x1]
  %v34 = vperm.slane %v32, 0
  %vm36 = vcmask 654336
  %v38 = vsel %vm36, %v20, 0
  %v41 = vsel %vm36, %v21, 0
  %43 = vmatpush.msra.mxu0 0.0
  %44 = vmatpush.msra.mxu0 0.0
  %45 = vmatpush.msra.mxu0 0.0
  %46 = vmatpush.msra.mxu0 0.0
  %47 = vmatpush.msra.mxu0 0.0
  %48 = vmatpush.msra.mxu0 0.0
  %49 = vmatpush.msra.mxu0 %v31
  %50 = vmatpush.msra.mxu0 %v30
  %51 = vmatpush.msra.mxu0 %v29
  %52 = vmatpush.msra.mxu0 %v28
  %53 = vmatpush.msra.mxu0 %v27
  %54 = vmatpush.msra.mxu0 %v26
  %55 = vmatpush.msra.mxu0 %v25
  %56 = vmatpush.msra.mxu0 %v24
  %57 = vmatpush.msra.mxu0 %v23
  %58 = vmatpush.msra.mxu0 %v22
  %59 = vmatmul.f32.gmra.mxu0 %v38
  %v60 = vpop.f32.mrf.mxu0
  %v61 = vadd.f32 %v34, %v60
  %62 = vmatmul.f32.gmra.mxu0 %v41
  %v63 = vpop.f32.mrf.mxu0
  %v64 = vadd.f32 %v34, %v63
  %65 = vdwg.mxu0
  %v66 = vmax.f32 %v61, 0.0
  %v67 = vmax.f32 %v64, 0.0
  %v68 = vld [vmem:[%s2] sm:$0xff]
  %v69 = vld [vmem:[%s2 + $0x8] sm:$0xff]
  %v70 = vld [vmem:[%s2 + $0x10] sm:$0xff]
  %v71 = vld [vmem:[%s2 + $0x18] sm:$0xff]
  %v72 = vld [vmem:[%s2 + $0x20] sm:$0xff]
  %v73 = vld [vmem:[%s3] sm:$0x1]
  %v75 = vperm.slane %v73, 0
  %vm77 = vcmask 326656
  %v79 = vsel %vm77, %v66, 0
  %v82 = vsel %vm77, %v67, 0
  %84 = vmatpush.msra.mxu0 0.0
  %85 = vmatpush.msra.mxu0 0.0
  %86 = vmatpush.msra.mxu0 0.0
  %87 = vmatpush.msra.mxu0 0.0
  %88 = vmatpush.msra.mxu0 0.0
  %89 = vmatpush.msra.mxu0 0.0
  %90 = vmatpush.msra.mxu0 0.0
  %91 = vmatpush.msra.mxu0 0.0
  %92 = vmatpush.msra.mxu0 0.0
  %93 = vmatpush.msra.mxu0 0.0
  %94 = vmatpush.msra.mxu0 0.0
  %95 = vmatpush.msra.mxu0 %v72
  %96 = vmatpush.msra.mxu0 %v71
  %97 = vmatpush.msra.mxu0 %v70
  %98 = vmatpush.msra.mxu0 %v69
  %99 = vmatpush.msra.mxu0 %v68
  %100 = vmatmul.f32.gmra.mxu0 %v79
  %v101 = vpop.f32.mrf.mxu0
  %v102 = vadd.f32 %v75, %v101
  %103 = vmatmul.f32.gmra.mxu0 %v82
  %v104 = vpop.f32.mrf.mxu0
  %v105 = vadd.f32 %v75, %v104
  %106 = vdwg.mxu0
  %vm107 = vcmask 130048
  %108 = vst.msk [vmem:[%s5] sm:$0xff] %vm107, %v102
  %109 = vst.msk [vmem:[%s5 + $0x8] sm:$0xff] %vm107, %v105
  // Predicated region
  $region22: #{mymodel_forward.1} parent=0 // pred_check
    _
  $region23: #{mymodel_forward.1} parent=0 // pred_check_branch
    %111 = sbr.rel (0) target = $region25
  $region24: #{mymodel_forward.1} parent=0 // pred_region
    _
  $region25: #{mymodel_forward.1} parent=0 // pred_fallthru
    _
  // Predicated region
  $region26: #{mymodel_forward.1} parent=0 // pred_check
    _
  $region27: #{mymodel_forward.1} parent=0 // pred_check_branch
    %113 = sbr.rel (0) target = $region29
  $region28: #{mymodel_forward.1} parent=0 // pred_region
    _
  $region29: #{mymodel_forward.1} parent=0 // pred_fallthru
    _

</llo_original>
